<compile_context>
chip_gen: v5e
topology: v5e:2x2
jax: 0.10.0
libtpu: 0.0.40
codegen_flags: <defaults>
</compile_context>

<pallas_src>
import functools

import jax
import jax.numpy as jnp
from jax.experimental import pallas as pl
from jax.experimental.pallas import tpu as pltpu

LANE = 128                      # TPU lane width; all padded dims are multiples of this.
K_CHUNK = 512                   # in-kernel reduction chunk over the resident h
FUSED_MAX_NODES = 2048          # fused path only for moderate padded N
FUSED_VMEM_BUDGET = 16 * 1024 * 1024
TILE_VMEM_BUDGET = 24 * 1024 * 1024   # per-step budget for the tiled path (v7x-safe)
VMEM_LIMIT = 32 * 1024 * 1024   # explicit scoped-VMEM limit for every pallas_call


def _round_up(x, m):
    return ((x + m - 1) // m) * m


def _pick_tile(n, cap):
    """Largest multiple of 128 that divides n and is <= cap (n is a multiple of 128)."""
    t = min(cap, n)
    t -= t % LANE
    while t > LANE:
        if n % t == 0:
            return t
        t -= LANE
    return LANE


def _pad_nodes(n):
    """Pad node count so row tiles never collapse to 128 for large graphs."""
    n_p = _round_up(n, LANE)
    if n_p > 512:
        n_p = _round_up(n, 256)   # multiple of 256 => a >=256 row tile always divides
    return n_p


# -----------------------------------------------------------------------------
# Kernels
# -----------------------------------------------------------------------------
def _linear_kernel(x_ref, w_ref, b_ref, o_ref):
    # o = x @ W + b    (bf16 operands, f32 accumulation, f32 bias)
    acc = jnp.dot(x_ref[...], w_ref[...], preferred_element_type=jnp.float32)
    o_ref[...] = (acc + b_ref[...]).astype(o_ref.dtype)


def _gcn_conv_kernel(adj_ref, h_ref, w_ref, b_ref, o_ref, acc_ref, *, kc):
    # One GCN layer for one adjacency row strip; h is fully VMEM-resident.
    #   o = relu( (A_hat[rows, :] @ h) @ W + b )
    n_p = h_ref.shape[0]
    acc_ref[...] = jnp.zeros_like(acc_ref)
    # Reduction chunked over the resident h (no HBM re-reads, bounded vreg use).
    for k0 in range(0, n_p, kc):
        sz = min(kc, n_p - k0)
        cols = pl.ds(k0, sz)
        acc_ref[...] += jnp.dot(adj_ref[:, cols], h_ref[cols, :],
                                preferred_element_type=jnp.float32)
    m = acc_ref[...].astype(jnp.bfloat16)                 # bf16 MXU path
    z = jnp.dot(m, w_ref[...], preferred_element_type=jnp.float32) + b_ref[...]
    o_ref[...] = jnp.maximum(z, 0.0).astype(o_ref.dtype)


def _fused_kernel(adj_ref, x_ref, ew_ref, eb_ref, cw_ref, cb_ref, dw_ref, db_ref,
                  o_ref, h0_ref, h1_ref, *, num_layers, tn, kc):
    # Whole forward in one invocation: adj / x / weights / h all VMEM-resident.
    n_p = adj_ref.shape[0]
    nt = n_p // tn

    # Encoder: h0 = x @ W_enc + b_enc   (row-tiled to bound live values)
    for i in range(nt):
        rows = pl.ds(i * tn, tn)
        z = jnp.dot(x_ref[rows, :], ew_ref[...],
                    preferred_element_type=jnp.float32) + eb_ref[...]
        h0_ref[rows, :] = z.astype(jnp.bfloat16)

    # GCN layers: ping-pong between the two resident h buffers (a layer's output
    # row needs *all* rows of the previous layer's h, so in-place is not safe).
    bufs = (h0_ref, h1_ref)
    for l in range(num_layers):
        src, dst = bufs[l % 2], bufs[(l + 1) % 2]
        w = cw_ref[l]                         # (H, H), hoisted out of the row loop
        b = cb_ref[l]                         # (1, H)
        for i in range(nt):
            rows = pl.ds(i * tn, tn)
            acc = jnp.zeros((tn, w.shape[0]), jnp.float32)
            for k0 in range(0, n_p, kc):
                sz = min(kc, n_p - k0)
                cols = pl.ds(k0, sz)
                acc = acc + jnp.dot(adj_ref[rows, cols], src[cols, :],
                                    preferred_element_type=jnp.float32)
            z = jnp.dot(acc.astype(jnp.bfloat16), w,
                        preferred_element_type=jnp.float32) + b
            dst[rows, :] = jnp.maximum(z, 0.0).astype(jnp.bfloat16)

    # Decoder: o = h_final @ W_dec + b_dec  (f32 output)
    hf = bufs[num_layers % 2]
    for i in range(nt):
        rows = pl.ds(i * tn, tn)
        z = jnp.dot(hf[rows, :], dw_ref[...],
                    preferred_element_type=jnp.float32) + db_ref[...]
        o_ref[rows, :] = z.astype(o_ref.dtype)


# -----------------------------------------------------------------------------
# pallas_call wrappers
# -----------------------------------------------------------------------------
def _linear(x, w, b, *, out_dtype):
    n, f_in = x.shape
    f_out = w.shape[1]
    tn = _pick_tile(n, 512)
    # TODO(synk): for very wide f_in add a K grid axis + f32 acc scratch so the
    #             full weight does not have to sit in VMEM per step.
    out_isize = jnp.dtype(out_dtype).itemsize
    cost = pl.CostEstimate(
        flops=int(2 * n * f_in * f_out), transcendentals=0,
        bytes_accessed=int(x.size * x.dtype.itemsize + w.size * w.dtype.itemsize
                           + b.size * b.dtype.itemsize + n * f_out * out_isize))
    return pl.pallas_call(
        _linear_kernel,
        out_shape=jax.ShapeDtypeStruct((n, f_out), out_dtype),
        grid=(n // tn,),
        in_specs=[
            pl.BlockSpec((tn, f_in), lambda i: (i, 0)),
            pl.BlockSpec((f_in, f_out), lambda i: (0, 0)),   # constant index -> fetched once
            pl.BlockSpec((1, f_out), lambda i: (0, 0)),
        ],
        out_specs=pl.BlockSpec((tn, f_out), lambda i: (i, 0)),
        compiler_params=pltpu.CompilerParams(
            dimension_semantics=("parallel",),
            vmem_limit_bytes=VMEM_LIMIT),
        cost_estimate=cost,
    )(x, w, b)


def _pick_conv_row_tile(n_p, hid, budget):
    t = _pick_tile(n_p, 512)

    def need(t):
        return (2 * t * n_p * 2            # adjacency row strip, double-buffered
                + 2 * n_p * hid * 2        # resident h (counted x2 conservatively)
                + 2 * (hid * hid * 2 + hid * 4)
                + 2 * t * hid * 2          # output tile, double-buffered
                + t * hid * 4)             # f32 accumulator scratch

    while t > LANE and need(t) > budget:
        t = _pick_tile(n_p, t - LANE)
    return t


def _gcn_conv(adj, h, w, b):
    n_p = adj.shape[0]
    hid = w.shape[1]
    kc = min(K_CHUNK, n_p)
    tn = _pick_conv_row_tile(n_p, hid, TILE_VMEM_BUDGET)
    kernel = functools.partial(_gcn_conv_kernel, kc=kc)
    cost = pl.CostEstimate(
        flops=int(2 * n_p * n_p * hid + 2 * n_p * hid * hid),
        transcendentals=0,
        bytes_accessed=int(adj.size * 2 + h.size * 2 + w.size * 2
                           + b.size * 4 + n_p * hid * 2))
    return pl.pallas_call(
        kernel,
        out_shape=jax.ShapeDtypeStruct((n_p, hid), jnp.bfloat16),
        grid=(n_p // tn,),
        in_specs=[
            pl.BlockSpec((tn, n_p), lambda i: (i, 0)),    # adjacency row strip (streamed)
            pl.BlockSpec((n_p, hid), lambda i: (0, 0)),   # h: constant index -> VMEM-resident
            pl.BlockSpec((hid, hid), lambda i: (0, 0)),   # layer weight
            pl.BlockSpec((1, hid), lambda i: (0, 0)),     # layer bias (f32)
        ],
        out_specs=pl.BlockSpec((tn, hid), lambda i: (i, 0)),
        scratch_shapes=[pltpu.VMEM((tn, hid), jnp.float32)],
        compiler_params=pltpu.CompilerParams(
            dimension_semantics=("parallel",),
            vmem_limit_bytes=VMEM_LIMIT),
        cost_estimate=cost,
    )(adj, h, w, b)


def _fused_forward(p, num_layers):
    adj, x = p["adj"], p["x"]
    n_p, in_p = x.shape
    hi_p = p["enc_w"].shape[1]
    ou_p = p["dec_w"].shape[1]
    tn = _pick_tile(n_p, 256)
    kc = min(K_CHUNK, n_p)
    kernel = functools.partial(_fused_kernel, num_layers=num_layers, tn=tn, kc=kc)
    operands = (adj, x, p["enc_w"], p["enc_b"], p["convs_w"], p["convs_b"],
                p["dec_w"], p["dec_b"])
    flops = (2 * n_p * in_p * hi_p
             + num_layers * (2 * n_p * n_p * hi_p + 2 * n_p * hi_p * hi_p)
             + 2 * n_p * hi_p * ou_p)
    in_bytes = sum(int(a.size) * a.dtype.itemsize for a in operands)
    cost = pl.CostEstimate(flops=int(flops), transcendentals=0,
                           bytes_accessed=int(in_bytes + n_p * ou_p * 4))
    return pl.pallas_call(
        kernel,
        out_shape=jax.ShapeDtypeStruct((n_p, ou_p), jnp.float32),
        scratch_shapes=[pltpu.VMEM((n_p, hi_p), jnp.bfloat16),
                        pltpu.VMEM((n_p, hi_p), jnp.bfloat16)],
        compiler_params=pltpu.CompilerParams(vmem_limit_bytes=VMEM_LIMIT),
        cost_estimate=cost,
    )(*operands)


# -----------------------------------------------------------------------------
# Graph glue: edge_index -> dense sym-normalized, padded adjacency (PyG gcn_norm)
# -----------------------------------------------------------------------------
def build_gcn_norm_adj_padded(edge_index, num_nodes, num_nodes_padded):
    src, dst = edge_index[0], edge_index[1]
    # Scatter-ADD directly into the padded buffer (duplicates count; message src->dst).
    a = jnp.zeros((num_nodes_padded, num_nodes_padded), jnp.float32)
    a = a.at[dst, src].add(1.0)
    # add_remaining_self_loops(fill=1.0) for REAL nodes only (padded rows stay zero).
    idx = jnp.arange(num_nodes)
    a = a.at[idx, idx].add(jnp.where(a[idx, idx] == 0.0, 1.0, 0.0))
    # D^-1/2 (A + I) D^-1/2, fused with the bf16 cast.  Padded rows/cols remain 0.
    deg = a.sum(axis=1)
    d = jnp.where(deg > 0.0, jax.lax.rsqrt(deg), 0.0)
    return (d[:, None] * a * d[None, :]).astype(jnp.bfloat16)


# -----------------------------------------------------------------------------
# Padding / dtype preparation shared by kernel path and reference path
# -----------------------------------------------------------------------------
def _prepare_inputs(x, edge_index, params):
    n, in_dim = x.shape
    hidden = params["enc_w"].shape[1]
    out_dim = params["dec_w"].shape[1]
    num_layers = params["convs_w"].shape[0]

    n_p = _pad_nodes(n)
    in_p = _round_up(in_dim, LANE)
    hi_p = _round_up(hidden, LANE)
    ou_p = _round_up(out_dim, LANE)

    def pad2(a, r, c):
        return jnp.pad(a, ((0, r - a.shape[0]), (0, c - a.shape[1])))

    padded = dict(
        adj=build_gcn_norm_adj_padded(edge_index, n, n_p),
        x=pad2(x, n_p, in_p).astype(jnp.bfloat16),
        enc_w=pad2(params["enc_w"], in_p, hi_p).astype(jnp.bfloat16),
        enc_b=pad2(params["enc_b"], 1, hi_p).astype(jnp.float32),
        convs_w=jnp.pad(params["convs_w"],
                        ((0, 0), (0, hi_p - hidden), (0, hi_p - hidden))
                        ).astype(jnp.bfloat16),
        convs_b=jnp.pad(params["convs_b"],
                        ((0, 0), (0, 0), (0, hi_p - hidden))
                        ).astype(jnp.float32),
        dec_w=pad2(params["dec_w"], hi_p, ou_p).astype(jnp.bfloat16),
        dec_b=pad2(params["dec_b"], 1, ou_p).astype(jnp.float32),
    )
    return padded, (n, out_dim, num_layers)


# -----------------------------------------------------------------------------
# Full forward: encoder -> L GCN layers -> decoder
# -----------------------------------------------------------------------------
def model_node_forward(x, edge_index, params, *, force_tiled=False):
    padded, (n, out_dim, num_layers) = _prepare_inputs(x, edge_index, params)
    n_p = padded["adj"].shape[0]
    hi_p = padded["enc_w"].shape[1]
    ou_p = padded["dec_w"].shape[1]

    # Total VMEM-resident bytes for the fully fused single-dispatch kernel.
    fused_bytes = (sum(int(v.size) * v.dtype.itemsize for v in padded.values())
                   + 2 * n_p * hi_p * 2        # ping-pong h scratch
                   + n_p * ou_p * 4)           # f32 output

    if (not force_tiled) and n_p <= FUSED_MAX_NODES and fused_bytes <= FUSED_VMEM_BUDGET:
        out = _fused_forward(padded, num_layers)
    else:
        h = _linear(padded["x"], padded["enc_w"], padded["enc_b"],
                    out_dtype=jnp.bfloat16)
        for l in range(num_layers):
            h = _gcn_conv(padded["adj"], h, padded["convs_w"][l],
                          padded["convs_b"][l])
        out = _linear(h, padded["dec_w"], padded["dec_b"], out_dtype=jnp.float32)
    return out[:n, :out_dim]


def model_node_reference(x, edge_index, params):
    """Pure-JAX reference with identical dtype transitions (for validation)."""
    padded, (n, out_dim, num_layers) = _prepare_inputs(x, edge_index, params)
    h = (jnp.dot(padded["x"], padded["enc_w"],
                 preferred_element_type=jnp.float32)
         + padded["enc_b"]).astype(jnp.bfloat16)
    for l in range(num_layers):
        m = jnp.dot(padded["adj"], h,
                    preferred_element_type=jnp.float32).astype(jnp.bfloat16)
        z = jnp.dot(m, padded["convs_w"][l],
                    preferred_element_type=jnp.float32) + padded["convs_b"][l]
        h = jnp.maximum(z, 0.0).astype(jnp.bfloat16)
    out = jnp.dot(h, padded["dec_w"],
                  preferred_element_type=jnp.float32) + padded["dec_b"]
    return out[:n, :out_dim]


# -----------------------------------------------------------------------------
# Parameter init (deterministic, PyTorch-Linear-style uniform)
# -----------------------------------------------------------------------------
def init_params(key, in_dim, hidden_dim, out_dim, num_layers):
    def linear(key, fan_in, fan_out):
        kw, kb = jax.random.split(key)
        bound = 1.0 / (fan_in ** 0.5)
        w = jax.random.uniform(kw, (fan_in, fan_out), jnp.float32, -bound, bound)
        b = jax.random.uniform(kb, (1, fan_out), jnp.float32, -bound, bound)
        return w, b

    keys = jax.random.split(key, num_layers + 2)
    enc_w, enc_b = linear(keys[0], in_dim, hidden_dim)
    conv_ws, conv_bs = [], []
    for l in range(num_layers):
        w, b = linear(keys[1 + l], hidden_dim, hidden_dim)
        conv_ws.append(w)
        conv_bs.append(b[None])                        # [1, 1, H]
    dec_w, dec_b = linear(keys[-1], hidden_dim, out_dim)
    return {
        "enc_w": enc_w, "enc_b": enc_b,
        "convs_w": jnp.stack(conv_ws, axis=0),         # [L, H, H]
        "convs_b": jnp.concatenate(conv_bs, axis=0),   # [L, 1, H]
        "dec_w": dec_w, "dec_b": dec_b,
    }


if __name__ == "__main__":
    key = jax.random.PRNGKey(0)
    k1, k2 = jax.random.split(key)

    # --- Test 1: tiny graph -> fully fused single-dispatch path ----------------
    N, IN_DIM, HIDDEN, OUT_DIM, NUM_LAYERS = 8, 16, 32, 4, 2
    k_x, k_e, k_p = jax.random.split(k1, 3)
    x = jax.random.normal(k_x, (N, IN_DIM), jnp.float32)
    edge_index = jax.random.randint(k_e, (2, 16), 0, N, dtype=jnp.int32)
    params = init_params(k_p, IN_DIM, HIDDEN, OUT_DIM, NUM_LAYERS)

    out = jax.block_until_ready(model_node_forward(x, edge_index, params))
    ref = jax.block_until_ready(model_node_reference(x, edge_index, params))
    assert out.shape == (N, OUT_DIM)
    assert bool(jnp.all(jnp.isfinite(out)))
    assert bool(jnp.allclose(out, ref, atol=1e-2, rtol=1e-2))

    # --- Test 2: larger graph, forced tiled path (resident-h GCN + row-tiled linears)
    N2, IN2, HID2, OUT2, L2 = 600, 24, 48, 6, 2
    k_x2, k_e2, k_p2 = jax.random.split(k2, 3)
    x2 = jax.random.normal(k_x2, (N2, IN2), jnp.float32)
    edge_index2 = jax.random.randint(k_e2, (2, 4000), 0, N2, dtype=jnp.int32)
    params2 = init_params(k_p2, IN2, HID2, OUT2, L2)

    out2 = jax.block_until_ready(
        model_node_forward(x2, edge_index2, params2, force_tiled=True))
    ref2 = jax.block_until_ready(model_node_reference(x2, edge_index2, params2))
    assert out2.shape == (N2, OUT2)
    assert bool(jnp.all(jnp.isfinite(out2)))
    assert bool(jnp.allclose(out2, ref2, atol=5e-2, rtol=5e-2))

    print("KERNEL_OK")
</pallas_src>

<mosaic_0001>
module attributes {stable_mosaic.version = 11 : i64} {
  func.func @_fused_kernel(%arg0: memref<128x128xbf16, #tpu.memory_space<vmem>>, %arg1: memref<128x128xbf16, #tpu.memory_space<vmem>>, %arg2: memref<128x128xbf16, #tpu.memory_space<vmem>>, %arg3: memref<1x128xf32, #tpu.memory_space<vmem>>, %arg4: memref<2x128x128xbf16, #tpu.memory_space<vmem>>, %arg5: memref<2x1x128xf32, #tpu.memory_space<vmem>>, %arg6: memref<128x128xbf16, #tpu.memory_space<vmem>>, %arg7: memref<1x128xf32, #tpu.memory_space<vmem>>, %arg8: memref<128x128xf32, #tpu.memory_space<vmem>>, %arg9: memref<128x128xbf16, #tpu.memory_space<vmem>>, %arg10: memref<128x128xbf16, #tpu.memory_space<vmem>>) attributes {dimension_semantics = [], scalar_prefetch = 0 : i64, scratch_operands = 2 : i64, tpu.core_type = #tpu.core_type<tc>} {
    %c0 = arith.constant 0 : index
    %c0_0 = arith.constant 0 : index
    %0 = vector.load %arg1[%c0, %c0_0] : memref<128x128xbf16, #tpu.memory_space<vmem>>, vector<128x128xbf16>
    %c0_1 = arith.constant 0 : index
    %c0_2 = arith.constant 0 : index
    %1 = vector.load %arg2[%c0_1, %c0_2] : memref<128x128xbf16, #tpu.memory_space<vmem>>, vector<128x128xbf16>
    %cst = arith.constant dense<0.000000e+00> : vector<128x128xf32>
    %2 = tpu.matmul %0, %1, %cst {dimension_numbers = #tpu.dot_dimension_numbers<[1], [0], [0], [1], [0, 0, 1, 1], [], []>} : vector<128x128xbf16>, vector<128x128xbf16>, vector<128x128xf32> -> vector<128x128xf32>
    %c0_3 = arith.constant 0 : index
    %c0_4 = arith.constant 0 : index
    %3 = vector.load %arg3[%c0_3, %c0_4] : memref<1x128xf32, #tpu.memory_space<vmem>>, vector<1x128xf32>
    %4 = vector.broadcast %3 : vector<1x128xf32> to vector<128x128xf32>
    %5 = arith.addf %2, %4 : vector<128x128xf32>
    %6 = arith.truncf %5 : vector<128x128xf32> to vector<128x128xbf16>
    %c0_5 = arith.constant 0 : index
    %c0_6 = arith.constant 0 : index
    %7 = vector.load %arg9[%c0_5, %c0_6] : memref<128x128xbf16, #tpu.memory_space<vmem>>, vector<128x128xbf16>
    tpu.vector_store %arg9[%c0_5, %c0_6], %6 {strides = array<i32>} : memref<128x128xbf16, #tpu.memory_space<vmem>>, vector<128x128xbf16>,
    %c0_7 = arith.constant 0 : index
    %c0_8 = arith.constant 0 : index
    %c0_9 = arith.constant 0 : index
    %8 = vector.load %arg4[%c0_7, %c0_8, %c0_9] : memref<2x128x128xbf16, #tpu.memory_space<vmem>>, vector<1x128x128xbf16>
    %9 = vector.shape_cast %8 : vector<1x128x128xbf16> to vector<128x128xbf16>
    %c0_10 = arith.constant 0 : index
    %c0_11 = arith.constant 0 : index
    %c0_12 = arith.constant 0 : index
    %10 = vector.load %arg5[%c0_10, %c0_11, %c0_12] : memref<2x1x128xf32, #tpu.memory_space<vmem>>, vector<1x1x128xf32>
    %11 = vector.shape_cast %10 : vector<1x1x128xf32> to vector<1x128xf32>
    %cst_13 = arith.constant 0.000000e+00 : f32
    %12 = vector.broadcast %cst_13 : f32 to vector<128x128xf32>
    %c0_14 = arith.constant 0 : index
    %c0_15 = arith.constant 0 : index
    %13 = vector.load %arg0[%c0_14, %c0_15] : memref<128x128xbf16, #tpu.memory_space<vmem>>, vector<128x128xbf16>
    %c0_16 = arith.constant 0 : index
    %c0_17 = arith.constant 0 : index
    %14 = vector.load %arg9[%c0_16, %c0_17] : memref<128x128xbf16, #tpu.memory_space<vmem>>, vector<128x128xbf16>
    %cst_18 = arith.constant dense<0.000000e+00> : vector<128x128xf32>
    %15 = tpu.matmul %13, %14, %cst_18 {dimension_numbers = #tpu.dot_dimension_numbers<[1], [0], [0], [1], [0, 0, 1, 1], [], []>} : vector<128x128xbf16>, vector<128x128xbf16>, vector<128x128xf32> -> vector<128x128xf32>
    %16 = arith.addf %12, %15 : vector<128x128xf32>
    %17 = arith.truncf %16 : vector<128x128xf32> to vector<128x128xbf16>
    %cst_19 = arith.constant dense<0.000000e+00> : vector<128x128xf32>
    %18 = tpu.matmul %17, %9, %cst_19 {dimension_numbers = #tpu.dot_dimension_numbers<[1], [0], [0], [1], [0, 0, 1, 1], [], []>} : vector<128x128xbf16>, vector<128x128xbf16>, vector<128x128xf32> -> vector<128x128xf32>
    %19 = vector.broadcast %11 : vector<1x128xf32> to vector<128x128xf32>
    %20 = arith.addf %18, %19 : vector<128x128xf32>
    %cst_20 = arith.constant 0.000000e+00 : f32
    %21 = vector.broadcast %cst_20 : f32 to vector<128x128xf32>
    %22 = arith.maximumf %20, %21 : vector<128x128xf32>
    %23 = arith.truncf %22 : vector<128x128xf32> to vector<128x128xbf16>
    %c0_21 = arith.constant 0 : index
    %c0_22 = arith.constant 0 : index
    %24 = vector.load %arg10[%c0_21, %c0_22] : memref<128x128xbf16, #tpu.memory_space<vmem>>, vector<128x128xbf16>
    tpu.vector_store %arg10[%c0_21, %c0_22], %23 {strides = array<i32>} : memref<128x128xbf16, #tpu.memory_space<vmem>>, vector<128x128xbf16>,
    %c1 = arith.constant 1 : index
    %c0_23 = arith.constant 0 : index
    %c0_24 = arith.constant 0 : index
    %25 = vector.load %arg4[%c1, %c0_23, %c0_24] : memref<2x128x128xbf16, #tpu.memory_space<vmem>>, vector<1x128x128xbf16>
    %26 = vector.shape_cast %25 : vector<1x128x128xbf16> to vector<128x128xbf16>
    %c1_25 = arith.constant 1 : index
    %c0_26 = arith.constant 0 : index
    %c0_27 = arith.constant 0 : index
    %27 = vector.load %arg5[%c1_25, %c0_26, %c0_27] : memref<2x1x128xf32, #tpu.memory_space<vmem>>, vector<1x1x128xf32>
    %28 = vector.shape_cast %27 : vector<1x1x128xf32> to vector<1x128xf32>
    %cst_28 = arith.constant 0.000000e+00 : f32
    %29 = vector.broadcast %cst_28 : f32 to vector<128x128xf32>
    %c0_29 = arith.constant 0 : index
    %c0_30 = arith.constant 0 : index
    %30 = vector.load %arg0[%c0_29, %c0_30] : memref<128x128xbf16, #tpu.memory_space<vmem>>, vector<128x128xbf16>
    %c0_31 = arith.constant 0 : index
    %c0_32 = arith.constant 0 : index
    %31 = vector.load %arg10[%c0_31, %c0_32] : memref<128x128xbf16, #tpu.memory_space<vmem>>, vector<128x128xbf16>
    %cst_33 = arith.constant dense<0.000000e+00> : vector<128x128xf32>
    %32 = tpu.matmul %30, %31, %cst_33 {dimension_numbers = #tpu.dot_dimension_numbers<[1], [0], [0], [1], [0, 0, 1, 1], [], []>} : vector<128x128xbf16>, vector<128x128xbf16>, vector<128x128xf32> -> vector<128x128xf32>
    %33 = arith.addf %29, %32 : vector<128x128xf32>
    %34 = arith.truncf %33 : vector<128x128xf32> to vector<128x128xbf16>
    %cst_34 = arith.constant dense<0.000000e+00> : vector<128x128xf32>
    %35 = tpu.matmul %34, %26, %cst_34 {dimension_numbers = #tpu.dot_dimension_numbers<[1], [0], [0], [1], [0, 0, 1, 1], [], []>} : vector<128x128xbf16>, vector<128x128xbf16>, vector<128x128xf32> -> vector<128x128xf32>
    %36 = vector.broadcast %28 : vector<1x128xf32> to vector<128x128xf32>
    %37 = arith.addf %35, %36 : vector<128x128xf32>
    %cst_35 = arith.constant 0.000000e+00 : f32
    %38 = vector.broadcast %cst_35 : f32 to vector<128x128xf32>
    %39 = arith.maximumf %37, %38 : vector<128x128xf32>
    %40 = arith.truncf %39 : vector<128x128xf32> to vector<128x128xbf16>
    %c0_36 = arith.constant 0 : index
    %c0_37 = arith.constant 0 : index
    %41 = vector.load %arg9[%c0_36, %c0_37] : memref<128x128xbf16, #tpu.memory_space<vmem>>, vector<128x128xbf16>
    tpu.vector_store %arg9[%c0_36, %c0_37], %40 {strides = array<i32>} : memref<128x128xbf16, #tpu.memory_space<vmem>>, vector<128x128xbf16>,
    %c0_38 = arith.constant 0 : index
    %c0_39 = arith.constant 0 : index
    %42 = vector.load %arg9[%c0_38, %c0_39] : memref<128x128xbf16, #tpu.memory_space<vmem>>, vector<128x128xbf16>
    %c0_40 = arith.constant 0 : index
    %c0_41 = arith.constant 0 : index
    %43 = vector.load %arg6[%c0_40, %c0_41] : memref<128x128xbf16, #tpu.memory_space<vmem>>, vector<128x128xbf16>
    %cst_42 = arith.constant dense<0.000000e+00> : vector<128x128xf32>
    %44 = tpu.matmul %42, %43, %cst_42 {dimension_numbers = #tpu.dot_dimension_numbers<[1], [0], [0], [1], [0, 0, 1, 1], [], []>} : vector<128x128xbf16>, vector<128x128xbf16>, vector<128x128xf32> -> vector<128x128xf32>
    %c0_43 = arith.constant 0 : index
    %c0_44 = arith.constant 0 : index
    %45 = vector.load %arg7[%c0_43, %c0_44] : memref<1x128xf32, #tpu.memory_space<vmem>>, vector<1x128xf32>
    %46 = vector.broadcast %45 : vector<1x128xf32> to vector<128x128xf32>
    %47 = arith.addf %44, %46 : vector<128x128xf32>
    %c0_45 = arith.constant 0 : index
    %c0_46 = arith.constant 0 : index
    %48 = vector.load %arg8[%c0_45, %c0_46] : memref<128x128xf32, #tpu.memory_space<vmem>>, vector<128x128xf32>
    tpu.vector_store %arg8[%c0_45, %c0_46], %47 {strides = array<i32>} : memref<128x128xf32, #tpu.memory_space<vmem>>, vector<128x128xf32>,
    return
  }
}

</mosaic_0001>

<llo_original>
// kernel: tpu_custom_call.1
$region0: #{tpu_custom_call.1}
  #allocation0 [shape = 'u32[]', space=smem, size = 0x4, offset = 0x4, fixed_abs, tag = 'smem constant byte address 0x4 - core index']
  #allocation1 [shape = 'u32[72,128]{1,0:T(1,128)}', space=vmem, size = 0x9000, scoped, tag = 'internal scratch']
  #allocation2 [shape = 'bf16[128,128]{1,0:T(8,128)(2,1)}', space=vmem, size = 0x8000, scoped, tag = 'scratch operand']
  #allocation3 [shape = 'bf16[128,128]{1,0:T(8,128)(2,1)}', space=vmem, size = 0x8000, scoped, tag = 'scratch operand']
  %s0 = inlined_call_operand.hbm [shape: bf16[128,128], index: 0, kind: input, shape index: {}]
  %s1 = inlined_call_operand.hbm [shape: bf16[128,128], index: 1, kind: input, shape index: {}]
  %s2 = inlined_call_operand.hbm [shape: bf16[128,128], index: 2, kind: input, shape index: {}]
  %s3 = inlined_call_operand.vmem [shape: f32[1,128], index: 3, kind: input, shape index: {}]
  %s4 = inlined_call_operand.hbm [shape: bf16[2,128,128], index: 4, kind: input, shape index: {}]
  %s5 = inlined_call_operand.vmem [shape: f32[2,1,128], index: 5, kind: input, shape index: {}]
  %s6 = inlined_call_operand.hbm [shape: bf16[128,128], index: 6, kind: input, shape index: {}]
  %s7 = inlined_call_operand.vmem [shape: f32[1,128], index: 7, kind: input, shape index: {}]
  %s8 = inlined_call_operand.hbm [shape: f32[128,128], index: 8, kind: output, shape index: {}]
  %s9 = sld [smem:[#allocation0]]
  $region62: #{tpu_custom_call.1} parent=0
    _
  %s11 = ssub.s32 1, %s9
  %s12 = scalar_select 0, %s11, %s9
  $region1: #{tpu_custom_call.1} parent=0
    #allocation4 [shape = 'u8[32768]{0}', space=vmem, size = 0x8000, scoped, tag = 'input window, operand 0, single buffered']
    #allocation5 [shape = 's32[1]{0}', space=sflag, size = 0x4, scoped, tag = 'scoped memory for tpu_custom_call.1']
    #allocation6 [shape = 's32[1]{0}', space=sflag, size = 0x4, scoped, tag = 'scoped memory for tpu_custom_call.1']
    #allocation7 [shape = 'u8[32768]{0}', space=vmem, size = 0x8000, scoped, tag = 'input window, operand 1, single buffered']
    #allocation8 [shape = 's32[1]{0}', space=sflag, size = 0x4, scoped, tag = 'scoped memory for tpu_custom_call.1']
    #allocation9 [shape = 'u8[32768]{0}', space=vmem, size = 0x8000, scoped, tag = 'input window, operand 2, single buffered']
    #allocation10 [shape = 'u8[65536]{0}', space=vmem, size = 0x10000, scoped, tag = 'input window, operand 4, single buffered']
    #allocation11 [shape = 's32[1]{0}', space=sflag, size = 0x4, scoped, tag = 'scoped memory for tpu_custom_call.1']
    #allocation12 [shape = 'u8[32768]{0}', space=vmem, size = 0x8000, scoped, tag = 'input window, operand 6, single buffered']
    #allocation13 [shape = 'u8[65536]{0}', space=vmem, size = 0x10000, scoped, tag = 'output window, operand 0, single buffered']
    %13 = vsyncpa [#allocation5], 0
    %14 = vsyncpa [#allocation8], 0
    %15 = vsyncpa [#allocation11], 0
    %16 = vsyncpa [#allocation6], 0
    // Predicated region
    $region2: #{tpu_custom_call.1} parent=1 // pred_check
      _
    $region3: #{tpu_custom_call.1} parent=1 // pred_check_branch
      %18 = sbr.rel (0) target = $region5
    $region4: #{tpu_custom_call.1} parent=1 // pred_region
      %20 = vsyncadd [#allocation5], 0
      %s21 = sshll.u32 %s0, 4
      %s22 = int_to_ptr.hbm [resolvable:$true] %s21
      %s23 = sshll.u32 [#allocation4], 4
      %s24 = int_to_ptr.vmem [resolvable:$true] %s23
      %29 = dma.hbm_to_vmem [thread:$0]  %s22, 1024, %s24, [#allocation5], 64, 64, 4
    $region5: #{tpu_custom_call.1} parent=1 // pred_fallthru
      _
    // Predicated region
    $region6: #{tpu_custom_call.1} parent=1 // pred_check
      _
    $region7: #{tpu_custom_call.1} parent=1 // pred_check_branch
      %31 = sbr.rel (0) target = $region9
    $region8: #{tpu_custom_call.1} parent=1 // pred_region
      %33 = vsyncadd [#allocation8], 0
      %s34 = sshll.u32 %s1, 4
      %s35 = int_to_ptr.hbm [resolvable:$true] %s34
      %s36 = sshll.u32 [#allocation7], 4
      %s37 = int_to_ptr.vmem [resolvable:$true] %s36
      %42 = dma.hbm_to_vmem [thread:$0]  %s35, 1024, %s37, [#allocation8], 64, 64, 4
    $region9: #{tpu_custom_call.1} parent=1 // pred_fallthru
      _
    // Predicated region
    $region10: #{tpu_custom_call.1} parent=1 // pred_check
      _
    $region11: #{tpu_custom_call.1} parent=1 // pred_check_branch
      %44 = sbr.rel (0) target = $region13
    $region12: #{tpu_custom_call.1} parent=1 // pred_region
      %46 = vsyncadd [#allocation8], 0
      %s47 = sshll.u32 %s2, 4
      %s48 = int_to_ptr.hbm [resolvable:$true] %s47
      %s49 = sshll.u32 [#allocation9], 4
      %s50 = int_to_ptr.vmem [resolvable:$true] %s49
      %55 = dma.hbm_to_vmem [thread:$0]  %s48, 1024, %s50, [#allocation8], 64, 64, 4
    $region13: #{tpu_custom_call.1} parent=1 // pred_fallthru
      _
    // Predicated region
    $region14: #{tpu_custom_call.1} parent=1 // pred_check
      _
    $region15: #{tpu_custom_call.1} parent=1 // pred_check_branch
      %57 = sbr.rel (0) target = $region17
    $region16: #{tpu_custom_call.1} parent=1 // pred_region
      _
    $region17: #{tpu_custom_call.1} parent=1 // pred_fallthru
      _
    // Predicated region
    $region18: #{tpu_custom_call.1} parent=1 // pred_check
      _
    $region19: #{tpu_custom_call.1} parent=1 // pred_check_branch
      %59 = sbr.rel (0) target = $region21
    $region20: #{tpu_custom_call.1} parent=1 // pred_region
      %61 = vsyncadd [#allocation11], 0
      %s62 = sshll.u32 %s4, 4
      %s63 = int_to_ptr.hbm [resolvable:$true] %s62
      %s64 = sshll.u32 [#allocation10], 4
      %s65 = int_to_ptr.vmem [resolvable:$true] %s64
      %70 = dma.hbm_to_vmem [thread:$0]  %s63, 2048, %s65, [#allocation11], 64, 64, 4
    $region21: #{tpu_custom_call.1} parent=1 // pred_fallthru
      _
    // Predicated region
    $region22: #{tpu_custom_call.1} parent=1 // pred_check
      _
    $region23: #{tpu_custom_call.1} parent=1 // pred_check_branch
      %72 = sbr.rel (0) target = $region25
    $region24: #{tpu_custom_call.1} parent=1 // pred_region
      _
    $region25: #{tpu_custom_call.1} parent=1 // pred_fallthru
      _
    // Predicated region
    $region26: #{tpu_custom_call.1} parent=1 // pred_check
      _
    $region27: #{tpu_custom_call.1} parent=1 // pred_check_branch
      %74 = sbr.rel (0) target = $region29
    $region28: #{tpu_custom_call.1} parent=1 // pred_region
      %76 = vsyncadd [#allocation11], 0
      %s77 = sshll.u32 %s6, 4
      %s78 = int_to_ptr.hbm [resolvable:$true] %s77
      %s79 = sshll.u32 [#allocation12], 4
      %s80 = int_to_ptr.vmem [resolvable:$true] %s79
      %85 = dma.hbm_to_vmem [thread:$0]  %s78, 1024, %s80, [#allocation11], 64, 64, 4
    $region29: #{tpu_custom_call.1} parent=1 // pred_fallthru
      _
    // Predicated region
    $region30: #{tpu_custom_call.1} parent=1 // pred_check
      _
    $region31: #{tpu_custom_call.1} parent=1 // pred_check_branch
      %87 = sbr.rel (0) target = $region33
    $region32: #{tpu_custom_call.1} parent=1 // pred_region
      _
    $region33: #{tpu_custom_call.1} parent=1 // pred_fallthru
      _
    // Predicated region
    $region34: #{tpu_custom_call.1} parent=1 // pred_check
      _
    $region35: #{tpu_custom_call.1} parent=1 // pred_check_branch
      %89 = sbr.rel (0) target = $region37
    $region36: #{tpu_custom_call.1} parent=1 // pred_region
      %91 = dma.done [#allocation5], 1024
    $region37: #{tpu_custom_call.1} parent=1 // pred_fallthru
      _
    // Predicated region
    $region38: #{tpu_custom_call.1} parent=1 // pred_check
      _
    $region39: #{tpu_custom_call.1} parent=1 // pred_check_branch
      %93 = sbr.rel (0) target = $region41
    $region40: #{tpu_custom_call.1} parent=1 // pred_region
      %95 = dma.done [#allocation8], 1024
    $region41: #{tpu_custom_call.1} parent=1 // pred_fallthru
      _
    // Predicated region
    $region42: #{tpu_custom_call.1} parent=1 // pred_check
      _
    $region43: #{tpu_custom_call.1} parent=1 // pred_check_branch
      %97 = sbr.rel (0) target = $region45
    $region44: #{tpu_custom_call.1} parent=1 // pred_region
      %99 = dma.done [#allocation8], 1024
    $region45: #{tpu_custom_call.1} parent=1 // pred_fallthru
      _
    // Predicated region
    $region46: #{tpu_custom_call.1} parent=1 // pred_check
      _
    $region47: #{tpu_custom_call.1} parent=1 // pred_check_branch
      %101 = sbr.rel (0) target = $region49
    $region48: #{tpu_custom_call.1} parent=1 // pred_region
      %103 = dma.done [#allocation11], 2048
    $region49: #{tpu_custom_call.1} parent=1 // pred_fallthru
      _
    // Predicated region
    $region50: #{tpu_custom_call.1} parent=1 // pred_check
      _
    $region51: #{tpu_custom_call.1} parent=1 // pred_check_branch
      %105 = sbr.rel (0) target = $region53
    $region52: #{tpu_custom_call.1} parent=1 // pred_region
      %107 = dma.done [#allocation11], 1024
    $region53: #{tpu_custom_call.1} parent=1 // pred_fallthru
      _
    %v108 = vld [vmem:[#allocation7] sm:$0xf]
    %v109 = vld [vmem:[#allocation7 + $0x4] sm:$0xf]
    %v110 = vld [vmem:[#allocation7 + $0x8] sm:$0xf]
    %v111 = vld [vmem:[#allocation7 + $0xc] sm:$0xf]
    %v112 = vld [vmem:[#allocation7 + $0x10] sm:$0xf]
    %v113 = vld [vmem:[#allocation7 + $0x14] sm:$0xf]
    %v114 = vld [vmem:[#allocation7 + $0x18] sm:$0xf]
    %v115 = vld [vmem:[#allocation7 + $0x1c] sm:$0xf]
    %v116 = vld [vmem:[#allocation7 + $0x20] sm:$0xf]
    %v117 = vld [vmem:[#allocation7 + $0x24] sm:$0xf]
    %v118 = vld [vmem:[#allocation7 + $0x28] sm:$0xf]
    %v119 = vld [vmem:[#allocation7 + $0x2c] sm:$0xf]
    %v120 = vld [vmem:[#allocation7 + $0x30] sm:$0xf]
    %v121 = vld [vmem:[#allocation7 + $0x34] sm:$0xf]
    %v122 = vld [vmem:[#allocation7 + $0x38] sm:$0xf]
    %v123 = vld [vmem:[#allocation7 + $0x3c] sm:$0xf]
    %v124 = vld [vmem:[#allocation9] sm:$0xf]
    %v125 = vld [vmem:[#allocation9 + $0x4] sm:$0xf]
    %v126 = vld [vmem:[#allocation9 + $0x8] sm:$0xf]
    %v127 = vld [vmem:[#allocation9 + $0xc] sm:$0xf]
    %v128 = vld [vmem:[#allocation9 + $0x10] sm:$0xf]
    %v129 = vld [vmem:[#allocation9 + $0x14] sm:$0xf]
    %v130 = vld [vmem:[#allocation9 + $0x18] sm:$0xf]
    %v131 = vld [vmem:[#allocation9 + $0x1c] sm:$0xf]
    %v132 = vld [vmem:[#allocation9 + $0x20] sm:$0xf]
    %v133 = vld [vmem:[#allocation9 + $0x24] sm:$0xf]
    %v134 = vld [vmem:[#allocation9 + $0x28] sm:$0xf]
    %v135 = vld [vmem:[#allocation9 + $0x2c] sm:$0xf]
    %v136 = vld [vmem:[#allocation9 + $0x30] sm:$0xf]
    %v137 = vld [vmem:[#allocation9 + $0x34] sm:$0xf]
    %v138 = vld [vmem:[#allocation9 + $0x38] sm:$0xf]
    %v139 = vld [vmem:[#allocation9 + $0x3c] sm:$0xf]
    %v140 = vld [vmem:[%s3] sm:$0x1]
    %v142 = vperm.slane %v140, 0
    %v160 = vunpack.c.l.b16 %v108
    %v161 = vunpack.c.l.b16 %v109
    %v162 = vunpack.c.l.b16 %v110
    %v163 = vunpack.c.l.b16 %v111
    %v164 = vunpack.c.l.b16 %v112
    %v165 = vunpack.c.l.b16 %v113
    %v166 = vunpack.c.l.b16 %v114
    %v167 = vunpack.c.l.b16 %v115
    %v168 = vunpack.c.l.b16 %v116
    %v169 = vunpack.c.l.b16 %v117
    %v170 = vunpack.c.l.b16 %v118
    %v171 = vunpack.c.l.b16 %v119
    %v172 = vunpack.c.l.b16 %v120
    %v173 = vunpack.c.l.b16 %v121
    %v174 = vunpack.c.l.b16 %v122
    %v175 = vunpack.c.l.b16 %v123
    %v176 = vpack.c.b16 %v161, %v160
    %v177 = vpack.c.b16 %v163, %v162
    %v178 = vpack.c.b16 %v165, %v164
    %v179 = vpack.c.b16 %v167, %v166
    %v180 = vpack.c.b16 %v169, %v168
    %v181 = vpack.c.b16 %v171, %v170
    %v182 = vpack.c.b16 %v173, %v172
    %v183 = vpack.c.b16 %v175, %v174
    %v208 = vunpack.c.l.b16 %v124
    %v209 = vunpack.c.l.b16 %v125
    %v210 = vunpack.c.l.b16 %v126
    %v211 = vunpack.c.l.b16 %v127
    %v212 = vunpack.c.l.b16 %v128
    %v213 = vunpack.c.l.b16 %v129
    %v214 = vunpack.c.l.b16 %v130
    %v215 = vunpack.c.l.b16 %v131
    %v216 = vunpack.c.l.b16 %v132
    %v217 = vunpack.c.l.b16 %v133
    %v218 = vunpack.c.l.b16 %v134
    %v219 = vunpack.c.l.b16 %v135
    %v220 = vunpack.c.l.b16 %v136
    %v221 = vunpack.c.l.b16 %v137
    %v222 = vunpack.c.l.b16 %v138
    %v223 = vunpack.c.l.b16 %v139
    %v224 = vpack.c.b16 %v209, %v208
    %v225 = vpack.c.b16 %v211, %v210
    %v226 = vpack.c.b16 %v213, %v212
    %v227 = vpack.c.b16 %v215, %v214
    %v228 = vpack.c.b16 %v217, %v216
    %v229 = vpack.c.b16 %v219, %v218
    %v230 = vpack.c.b16 %v221, %v220
    %v231 = vpack.c.b16 %v223, %v222
    %240 = vmatpush.bf16.msra.mxu0 %v231
    %241 = vmatpush.bf16.msra.mxu0 %v230
    %242 = vmatpush.bf16.msra.mxu0 %v229
    %243 = vmatpush.bf16.msra.mxu0 %v228
    %244 = vmatpush.bf16.msra.mxu0 %v227
    %245 = vmatpush.bf16.msra.mxu0 %v226
    %246 = vmatpush.bf16.msra.mxu0 %v225
    %247 = vmatpush.bf16.msra.mxu0 %v224
    %248 = vmatmul.bf16.gmra.mxu0 %v176
    %v249 = vpop.f32.mrf.mxu0
    %v250 = vadd.f32 %v142, %v249
    %v251 = vpop.f32.mrf.mxu0
    %v252 = vadd.f32 %v142, %v251
    %253 = vmatmul.bf16.gmra.mxu0 %v177
    %v254 = vpop.f32.mrf.mxu0
    %v255 = vadd.f32 %v142, %v254
    %v256 = vpop.f32.mrf.mxu0
    %v257 = vadd.f32 %v142, %v256
    %258 = vmatmul.bf16.gmra.mxu0 %v178
    %v259 = vpop.f32.mrf.mxu0
    %v260 = vadd.f32 %v142, %v259
    %v261 = vpop.f32.mrf.mxu0
    %v262 = vadd.f32 %v142, %v261
    %263 = vmatmul.bf16.gmra.mxu0 %v179
    %v264 = vpop.f32.mrf.mxu0
    %v265 = vadd.f32 %v142, %v264
    %v266 = vpop.f32.mrf.mxu0
    %v267 = vadd.f32 %v142, %v266
    %268 = vmatmul.bf16.gmra.mxu0 %v180
    %v269 = vpop.f32.mrf.mxu0
    %v270 = vadd.f32 %v142, %v269
    %v271 = vpop.f32.mrf.mxu0
    %v272 = vadd.f32 %v142, %v271
    %273 = vmatmul.bf16.gmra.mxu0 %v181
    %v274 = vpop.f32.mrf.mxu0
    %v275 = vadd.f32 %v142, %v274
    %v276 = vpop.f32.mrf.mxu0
    %v277 = vadd.f32 %v142, %v276
    %278 = vmatmul.bf16.gmra.mxu0 %v182
    %v279 = vpop.f32.mrf.mxu0
    %v280 = vadd.f32 %v142, %v279
    %v281 = vpop.f32.mrf.mxu0
    %v282 = vadd.f32 %v142, %v281
    %283 = vmatmul.bf16.gmra.mxu0 %v183
    %v284 = vpop.f32.mrf.mxu0
    %v285 = vadd.f32 %v142, %v284
    %v286 = vpop.f32.mrf.mxu0
    %v287 = vadd.f32 %v142, %v286
    %288 = vdwg.mxu0
    %v289 = vpack.c.bf16 %v250, %v250
    %v290 = vpack.c.bf16 %v252, %v252
    %v291 = vpack.c.bf16 %v255, %v255
    %v292 = vpack.c.bf16 %v257, %v257
    %v293 = vpack.c.bf16 %v260, %v260
    %v294 = vpack.c.bf16 %v262, %v262
    %v295 = vpack.c.bf16 %v265, %v265
    %v296 = vpack.c.bf16 %v267, %v267
    %v297 = vpack.c.bf16 %v270, %v270
    %v298 = vpack.c.bf16 %v272, %v272
    %v299 = vpack.c.bf16 %v275, %v275
    %v300 = vpack.c.bf16 %v277, %v277
    %v301 = vpack.c.bf16 %v280, %v280
    %v302 = vpack.c.bf16 %v282, %v282
    %v303 = vpack.c.bf16 %v285, %v285
    %v304 = vpack.c.bf16 %v287, %v287
    %305 = vst [vmem:[#allocation2] sm:$0xf] %v289
    %306 = vst [vmem:[#allocation2 + $0x4] sm:$0xf] %v290
    %307 = vst [vmem:[#allocation2 + $0x8] sm:$0xf] %v291
    %308 = vst [vmem:[#allocation2 + $0xc] sm:$0xf] %v292
    %309 = vst [vmem:[#allocation2 + $0x10] sm:$0xf] %v293
    %310 = vst [vmem:[#allocation2 + $0x14] sm:$0xf] %v294
    %311 = vst [vmem:[#allocation2 + $0x18] sm:$0xf] %v295
    %312 = vst [vmem:[#allocation2 + $0x1c] sm:$0xf] %v296
    %313 = vst [vmem:[#allocation2 + $0x20] sm:$0xf] %v297
    %314 = vst [vmem:[#allocation2 + $0x24] sm:$0xf] %v298
    %315 = vst [vmem:[#allocation2 + $0x28] sm:$0xf] %v299
    %316 = vst [vmem:[#allocation2 + $0x2c] sm:$0xf] %v300
    %317 = vst [vmem:[#allocation2 + $0x30] sm:$0xf] %v301
    %318 = vst [vmem:[#allocation2 + $0x34] sm:$0xf] %v302
    %319 = vst [vmem:[#allocation2 + $0x38] sm:$0xf] %v303
    %320 = vst [vmem:[#allocation2 + $0x3c] sm:$0xf] %v304
    %v321 = vld [vmem:[#allocation10] sm:$0xf]
    %v322 = vld [vmem:[#allocation10 + $0x4] sm:$0xf]
    %v323 = vld [vmem:[#allocation10 + $0x8] sm:$0xf]
    %v324 = vld [vmem:[#allocation10 + $0xc] sm:$0xf]
    %v325 = vld [vmem:[#allocation10 + $0x10] sm:$0xf]
    %v326 = vld [vmem:[#allocation10 + $0x14] sm:$0xf]
    %v327 = vld [vmem:[#allocation10 + $0x18] sm:$0xf]
    %v328 = vld [vmem:[#allocation10 + $0x1c] sm:$0xf]
    %v329 = vld [vmem:[#allocation10 + $0x20] sm:$0xf]
    %v330 = vld [vmem:[#allocation10 + $0x24] sm:$0xf]
    %v331 = vld [vmem:[#allocation10 + $0x28] sm:$0xf]
    %v332 = vld [vmem:[#allocation10 + $0x2c] sm:$0xf]
    %v333 = vld [vmem:[#allocation10 + $0x30] sm:$0xf]
    %v334 = vld [vmem:[#allocation10 + $0x34] sm:$0xf]
    %v335 = vld [vmem:[#allocation10 + $0x38] sm:$0xf]
    %v336 = vld [vmem:[#allocation10 + $0x3c] sm:$0xf]
    %v337 = vld [vmem:[%s5] sm:$0x1]
    %v338 = vld [vmem:[#allocation4] sm:$0xf]
    %v339 = vld [vmem:[#allocation4 + $0x4] sm:$0xf]
    %v340 = vld [vmem:[#allocation4 + $0x8] sm:$0xf]
    %v341 = vld [vmem:[#allocation4 + $0xc] sm:$0xf]
    %v342 = vld [vmem:[#allocation4 + $0x10] sm:$0xf]
    %v343 = vld [vmem:[#allocation4 + $0x14] sm:$0xf]
    %v344 = vld [vmem:[#allocation4 + $0x18] sm:$0xf]
    %v345 = vld [vmem:[#allocation4 + $0x1c] sm:$0xf]
    %v346 = vld [vmem:[#allocation4 + $0x20] sm:$0xf]
    %v347 = vld [vmem:[#allocation4 + $0x24] sm:$0xf]
    %v348 = vld [vmem:[#allocation4 + $0x28] sm:$0xf]
    %v349 = vld [vmem:[#allocation4 + $0x2c] sm:$0xf]
    %v350 = vld [vmem:[#allocation4 + $0x30] sm:$0xf]
    %v351 = vld [vmem:[#allocation4 + $0x34] sm:$0xf]
    %v352 = vld [vmem:[#allocation4 + $0x38] sm:$0xf]
    %v353 = vld [vmem:[#allocation4 + $0x3c] sm:$0xf]
    %v354 = vld [vmem:[#allocation2] sm:$0xf]
    %v355 = vld [vmem:[#allocation2 + $0x4] sm:$0xf]
    %v356 = vld [vmem:[#allocation2 + $0x8] sm:$0xf]
    %v357 = vld [vmem:[#allocation2 + $0xc] sm:$0xf]
    %v358 = vld [vmem:[#allocation2 + $0x10] sm:$0xf]
    %v359 = vld [vmem:[#allocation2 + $0x14] sm:$0xf]
    %v360 = vld [vmem:[#allocation2 + $0x18] sm:$0xf]
    %v361 = vld [vmem:[#allocation2 + $0x1c] sm:$0xf]
    %v362 = vld [vmem:[#allocation2 + $0x20] sm:$0xf]
    %v363 = vld [vmem:[#allocation2 + $0x24] sm:$0xf]
    %v364 = vld [vmem:[#allocation2 + $0x28] sm:$0xf]
    %v365 = vld [vmem:[#allocation2 + $0x2c] sm:$0xf]
    %v366 = vld [vmem:[#allocation2 + $0x30] sm:$0xf]
    %v367 = vld [vmem:[#allocation2 + $0x34] sm:$0xf]
    %v368 = vld [vmem:[#allocation2 + $0x38] sm:$0xf]
    %v369 = vld [vmem:[#allocation2 + $0x3c] sm:$0xf]
    %v386 = vunpack.c.l.b16 %v338
    %v387 = vunpack.c.l.b16 %v339
    %v388 = vunpack.c.l.b16 %v340
    %v389 = vunpack.c.l.b16 %v341
    %v390 = vunpack.c.l.b16 %v342
    %v391 = vunpack.c.l.b16 %v343
    %v392 = vunpack.c.l.b16 %v344
    %v393 = vunpack.c.l.b16 %v345
    %v394 = vunpack.c.l.b16 %v346
    %v395 = vunpack.c.l.b16 %v347
    %v396 = vunpack.c.l.b16 %v348
    %v397 = vunpack.c.l.b16 %v349
    %v398 = vunpack.c.l.b16 %v350
    %v399 = vunpack.c.l.b16 %v351
    %v400 = vunpack.c.l.b16 %v352
    %v401 = vunpack.c.l.b16 %v353
    %v402 = vpack.c.b16 %v387, %v386
    %v403 = vpack.c.b16 %v389, %v388
    %v404 = vpack.c.b16 %v391, %v390
    %v405 = vpack.c.b16 %v393, %v392
    %v406 = vpack.c.b16 %v395, %v394
    %v407 = vpack.c.b16 %v397, %v396
    %v408 = vpack.c.b16 %v399, %v398
    %v409 = vpack.c.b16 %v401, %v400
    %v434 = vunpack.c.l.b16 %v354
    %v435 = vunpack.c.l.b16 %v355
    %v436 = vunpack.c.l.b16 %v356
    %v437 = vunpack.c.l.b16 %v357
    %v438 = vunpack.c.l.b16 %v358
    %v439 = vunpack.c.l.b16 %v359
    %v440 = vunpack.c.l.b16 %v360
    %v441 = vunpack.c.l.b16 %v361
    %v442 = vunpack.c.l.b16 %v362
    %v443 = vunpack.c.l.b16 %v363
    %v444 = vunpack.c.l.b16 %v364
    %v445 = vunpack.c.l.b16 %v365
    %v446 = vunpack.c.l.b16 %v366
    %v447 = vunpack.c.l.b16 %v367
    %v448 = vunpack.c.l.b16 %v368
    %v449 = vunpack.c.l.b16 %v369
    %v450 = vpack.c.b16 %v435, %v434
    %v451 = vpack.c.b16 %v437, %v436
    %v452 = vpack.c.b16 %v439, %v438
    %v453 = vpack.c.b16 %v441, %v440
    %v454 = vpack.c.b16 %v443, %v442
    %v455 = vpack.c.b16 %v445, %v444
    %v456 = vpack.c.b16 %v447, %v446
    %v457 = vpack.c.b16 %v449, %v448
    %466 = vmatpush.bf16.msra.mxu0 %v457
    %467 = vmatpush.bf16.msra.mxu0 %v456
    %468 = vmatpush.bf16.msra.mxu0 %v455
    %469 = vmatpush.bf16.msra.mxu0 %v454
    %470 = vmatpush.bf16.msra.mxu0 %v453
    %471 = vmatpush.bf16.msra.mxu0 %v452
    %472 = vmatpush.bf16.msra.mxu0 %v451
    %473 = vmatpush.bf16.msra.mxu0 %v450
    %474 = vmatmul.bf16.gmra.mxu0 %v402
    %v475 = vpop.f32.mrf.mxu0
    %v476 = vadd.f32 0.0, %v475
    %v477 = vpop.f32.mrf.mxu0
    %v478 = vadd.f32 0.0, %v477
    %479 = vmatmul.bf16.gmra.mxu0 %v403
    %v480 = vpop.f32.mrf.mxu0
    %v481 = vadd.f32 0.0, %v480
    %v482 = vpop.f32.mrf.mxu0
    %v483 = vadd.f32 0.0, %v482
    %484 = vmatmul.bf16.gmra.mxu0 %v404
    %v485 = vpop.f32.mrf.mxu0
    %v486 = vadd.f32 0.0, %v485
    %v487 = vpop.f32.mrf.mxu0
    %v488 = vadd.f32 0.0, %v487
    %489 = vmatmul.bf16.gmra.mxu0 %v405
    %v490 = vpop.f32.mrf.mxu0
    %v491 = vadd.f32 0.0, %v490
    %v492 = vpop.f32.mrf.mxu0
    %v493 = vadd.f32 0.0, %v492
    %494 = vmatmul.bf16.gmra.mxu0 %v406
    %v495 = vpop.f32.mrf.mxu0
    %v496 = vadd.f32 0.0, %v495
    %v497 = vpop.f32.mrf.mxu0
    %v498 = vadd.f32 0.0, %v497
    %499 = vmatmul.bf16.gmra.mxu0 %v407
    %v500 = vpop.f32.mrf.mxu0
    %v501 = vadd.f32 0.0, %v500
    %v502 = vpop.f32.mrf.mxu0
    %v503 = vadd.f32 0.0, %v502
    %504 = vmatmul.bf16.gmra.mxu0 %v408
    %v505 = vpop.f32.mrf.mxu0
    %v506 = vadd.f32 0.0, %v505
    %v507 = vpop.f32.mrf.mxu0
    %v508 = vadd.f32 0.0, %v507
    %509 = vmatmul.bf16.gmra.mxu0 %v409
    %v510 = vpop.f32.mrf.mxu0
    %v511 = vadd.f32 0.0, %v510
    %v512 = vpop.f32.mrf.mxu0
    %v513 = vadd.f32 0.0, %v512
    %514 = vdwg.mxu0
    %v515 = vpack.c.bf16 %v478, %v476
    %v516 = vpack.c.bf16 %v483, %v481
    %v517 = vpack.c.bf16 %v488, %v486
    %v518 = vpack.c.bf16 %v493, %v491
    %v519 = vpack.c.bf16 %v498, %v496
    %v520 = vpack.c.bf16 %v503, %v501
    %v521 = vpack.c.bf16 %v508, %v506
    %v522 = vpack.c.bf16 %v513, %v511
    %v524 = vperm.slane %v337, 0
    %v542 = vunpack.c.l.b16 %v321
    %v543 = vunpack.c.l.b16 %v322
    %v544 = vunpack.c.l.b16 %v323
    %v545 = vunpack.c.l.b16 %v324
    %v546 = vunpack.c.l.b16 %v325
    %v547 = vunpack.c.l.b16 %v326
    %v548 = vunpack.c.l.b16 %v327
    %v549 = vunpack.c.l.b16 %v328
    %v550 = vunpack.c.l.b16 %v329
    %v551 = vunpack.c.l.b16 %v330
    %v552 = vunpack.c.l.b16 %v331
    %v553 = vunpack.c.l.b16 %v332
    %v554 = vunpack.c.l.b16 %v333
    %v555 = vunpack.c.l.b16 %v334
    %v556 = vunpack.c.l.b16 %v335
    %v557 = vunpack.c.l.b16 %v336
    %v558 = vpack.c.b16 %v543, %v542
    %v559 = vpack.c.b16 %v545, %v544
    %v560 = vpack.c.b16 %v547, %v546
    %v561 = vpack.c.b16 %v549, %v548
    %v562 = vpack.c.b16 %v551, %v550
    %v563 = vpack.c.b16 %v553, %v552
    %v564 = vpack.c.b16 %v555, %v554
    %v565 = vpack.c.b16 %v557, %v556
    %574 = vmatpush.bf16.msra.mxu0 %v565
    %575 = vmatpush.bf16.msra.mxu0 %v564
    %576 = vmatpush.bf16.msra.mxu0 %v563
    %577 = vmatpush.bf16.msra.mxu0 %v562
    %578 = vmatpush.bf16.msra.mxu0 %v561
    %579 = vmatpush.bf16.msra.mxu0 %v560
    %580 = vmatpush.bf16.msra.mxu0 %v559
    %581 = vmatpush.bf16.msra.mxu0 %v558
    %582 = vmatmul.bf16.gmra.mxu0 %v515
    %v583 = vpop.f32.mrf.mxu0
    %v584 = vadd.f32 %v524, %v583
    %v585 = vpop.f32.mrf.mxu0
    %v586 = vadd.f32 %v524, %v585
    %587 = vmatmul.bf16.gmra.mxu0 %v516
    %v588 = vpop.f32.mrf.mxu0
    %v589 = vadd.f32 %v524, %v588
    %v590 = vpop.f32.mrf.mxu0
    %v591 = vadd.f32 %v524, %v590
    %592 = vmatmul.bf16.gmra.mxu0 %v517
    %v593 = vpop.f32.mrf.mxu0
    %v594 = vadd.f32 %v524, %v593
    %v595 = vpop.f32.mrf.mxu0
    %v596 = vadd.f32 %v524, %v595
    %597 = vmatmul.bf16.gmra.mxu0 %v518
    %v598 = vpop.f32.mrf.mxu0
    %v599 = vadd.f32 %v524, %v598
    %v600 = vpop.f32.mrf.mxu0
    %v601 = vadd.f32 %v524, %v600
    %602 = vmatmul.bf16.gmra.mxu0 %v519
    %v603 = vpop.f32.mrf.mxu0
    %v604 = vadd.f32 %v524, %v603
    %v605 = vpop.f32.mrf.mxu0
    %v606 = vadd.f32 %v524, %v605
    %607 = vmatmul.bf16.gmra.mxu0 %v520
    %v608 = vpop.f32.mrf.mxu0
    %v609 = vadd.f32 %v524, %v608
    %v610 = vpop.f32.mrf.mxu0
    %v611 = vadd.f32 %v524, %v610
    %612 = vmatmul.bf16.gmra.mxu0 %v521
    %v613 = vpop.f32.mrf.mxu0
    %v614 = vadd.f32 %v524, %v613
    %v615 = vpop.f32.mrf.mxu0
    %v616 = vadd.f32 %v524, %v615
    %617 = vmatmul.bf16.gmra.mxu0 %v522
    %v618 = vpop.f32.mrf.mxu0
    %v619 = vadd.f32 %v524, %v618
    %v620 = vpop.f32.mrf.mxu0
    %v621 = vadd.f32 %v524, %v620
    %622 = vdwg.mxu0
    %v623 = vmax.f32 %v584, 0.0
    %v624 = vmax.f32 %v586, 0.0
    %v625 = vmax.f32 %v589, 0.0
    %v626 = vmax.f32 %v591, 0.0
    %v627 = vmax.f32 %v594, 0.0
    %v628 = vmax.f32 %v596, 0.0
    %v629 = vmax.f32 %v599, 0.0
    %v630 = vmax.f32 %v601, 0.0
    %v631 = vmax.f32 %v604, 0.0
    %v632 = vmax.f32 %v606, 0.0
    %v633 = vmax.f32 %v609, 0.0
    %v634 = vmax.f32 %v611, 0.0
    %v635 = vmax.f32 %v614, 0.0
    %v636 = vmax.f32 %v616, 0.0
    %v637 = vmax.f32 %v619, 0.0
    %v638 = vmax.f32 %v621, 0.0
    %v639 = vpack.c.bf16 %v623, %v623
    %v640 = vpack.c.bf16 %v624, %v624
    %v641 = vpack.c.bf16 %v625, %v625
    %v642 = vpack.c.bf16 %v626, %v626
    %v643 = vpack.c.bf16 %v627, %v627
    %v644 = vpack.c.bf16 %v628, %v628
    %v645 = vpack.c.bf16 %v629, %v629
    %v646 = vpack.c.bf16 %v630, %v630
    %v647 = vpack.c.bf16 %v631, %v631
    %v648 = vpack.c.bf16 %v632, %v632
    %v649 = vpack.c.bf16 %v633, %v633
    %v650 = vpack.c.bf16 %v634, %v634
    %v651 = vpack.c.bf16 %v635, %v635
    %v652 = vpack.c.bf16 %v636, %v636
    %v653 = vpack.c.bf16 %v637, %v637
    %v654 = vpack.c.bf16 %v638, %v638
    %655 = vst [vmem:[#allocation3] sm:$0xf] %v639
    %656 = vst [vmem:[#allocation3 + $0x4] sm:$0xf] %v640
    %657 = vst [vmem:[#allocation3 + $0x8] sm:$0xf] %v641
    %658 = vst [vmem:[#allocation3 + $0xc] sm:$0xf] %v642
    %659 = vst [vmem:[#allocation3 + $0x10] sm:$0xf] %v643
    %660 = vst [vmem:[#allocation3 + $0x14] sm:$0xf] %v644
    %661 = vst [vmem:[#allocation3 + $0x18] sm:$0xf] %v645
    %662 = vst [vmem:[#allocation3 + $0x1c] sm:$0xf] %v646
    %663 = vst [vmem:[#allocation3 + $0x20] sm:$0xf] %v647
    %664 = vst [vmem:[#allocation3 + $0x24] sm:$0xf] %v648
    %665 = vst [vmem:[#allocation3 + $0x28] sm:$0xf] %v649
    %666 = vst [vmem:[#allocation3 + $0x2c] sm:$0xf] %v650
    %667 = vst [vmem:[#allocation3 + $0x30] sm:$0xf] %v651
    %668 = vst [vmem:[#allocation3 + $0x34] sm:$0xf] %v652
    %669 = vst [vmem:[#allocation3 + $0x38] sm:$0xf] %v653
    %670 = vst [vmem:[#allocation3 + $0x3c] sm:$0xf] %v654
    %s671 = scalar_lea.vmem [#allocation10], 64
    %v672 = vld [vmem:[%s671] sm:$0xf]
    %v673 = vld [vmem:[%s671 + $0x4] sm:$0xf]
    %v674 = vld [vmem:[%s671 + $0x8] sm:$0xf]
    %v675 = vld [vmem:[%s671 + $0xc] sm:$0xf]
    %v676 = vld [vmem:[%s671 + $0x10] sm:$0xf]
    %v677 = vld [vmem:[%s671 + $0x14] sm:$0xf]
    %v678 = vld [vmem:[%s671 + $0x18] sm:$0xf]
    %v679 = vld [vmem:[%s671 + $0x1c] sm:$0xf]
    %v680 = vld [vmem:[%s671 + $0x20] sm:$0xf]
    %v681 = vld [vmem:[%s671 + $0x24] sm:$0xf]
    %v682 = vld [vmem:[%s671 + $0x28] sm:$0xf]
    %v683 = vld [vmem:[%s671 + $0x2c] sm:$0xf]
    %v684 = vld [vmem:[%s671 + $0x30] sm:$0xf]
    %v685 = vld [vmem:[%s671 + $0x34] sm:$0xf]
    %v686 = vld [vmem:[%s671 + $0x38] sm:$0xf]
    %v687 = vld [vmem:[%s671 + $0x3c] sm:$0xf]
    %s688 = scalar_lea.vmem %s5, 1
    %v689 = vld [vmem:[%s688] sm:$0x1]
    %v690 = vld [vmem:[#allocation4] sm:$0xf]
    %v691 = vld [vmem:[#allocation4 + $0x4] sm:$0xf]
    %v692 = vld [vmem:[#allocation4 + $0x8] sm:$0xf]
    %v693 = vld [vmem:[#allocation4 + $0xc] sm:$0xf]
    %v694 = vld [vmem:[#allocation4 + $0x10] sm:$0xf]
    %v695 = vld [vmem:[#allocation4 + $0x14] sm:$0xf]
    %v696 = vld [vmem:[#allocation4 + $0x18] sm:$0xf]
    %v697 = vld [vmem:[#allocation4 + $0x1c] sm:$0xf]
    %v698 = vld [vmem:[#allocation4 + $0x20] sm:$0xf]
    %v699 = vld [vmem:[#allocation4 + $0x24] sm:$0xf]
    %v700 = vld [vmem:[#allocation4 + $0x28] sm:$0xf]
    %v701 = vld [vmem:[#allocation4 + $0x2c] sm:$0xf]
    %v702 = vld [vmem:[#allocation4 + $0x30] sm:$0xf]
    %v703 = vld [vmem:[#allocation4 + $0x34] sm:$0xf]
    %v704 = vld [vmem:[#allocation4 + $0x38] sm:$0xf]
    %v705 = vld [vmem:[#allocation4 + $0x3c] sm:$0xf]
    %v706 = vld [vmem:[#allocation3] sm:$0xf]
    %v707 = vld [vmem:[#allocation3 + $0x4] sm:$0xf]
    %v708 = vld [vmem:[#allocation3 + $0x8] sm:$0xf]
    %v709 = vld [vmem:[#allocation3 + $0xc] sm:$0xf]
    %v710 = vld [vmem:[#allocation3 + $0x10] sm:$0xf]
    %v711 = vld [vmem:[#allocation3 + $0x14] sm:$0xf]
    %v712 = vld [vmem:[#allocation3 + $0x18] sm:$0xf]
    %v713 = vld [vmem:[#allocation3 + $0x1c] sm:$0xf]
    %v714 = vld [vmem:[#allocation3 + $0x20] sm:$0xf]
    %v715 = vld [vmem:[#allocation3 + $0x24] sm:$0xf]
    %v716 = vld [vmem:[#allocation3 + $0x28] sm:$0xf]
    %v717 = vld [vmem:[#allocation3 + $0x2c] sm:$0xf]
    %v718 = vld [vmem:[#allocation3 + $0x30] sm:$0xf]
    %v719 = vld [vmem:[#allocation3 + $0x34] sm:$0xf]
    %v720 = vld [vmem:[#allocation3 + $0x38] sm:$0xf]
    %v721 = vld [vmem:[#allocation3 + $0x3c] sm:$0xf]
    %v738 = vunpack.c.l.b16 %v690
    %v739 = vunpack.c.l.b16 %v691
    %v740 = vunpack.c.l.b16 %v692
    %v741 = vunpack.c.l.b16 %v693
    %v742 = vunpack.c.l.b16 %v694
    %v743 = vunpack.c.l.b16 %v695
    %v744 = vunpack.c.l.b16 %v696
    %v745 = vunpack.c.l.b16 %v697
    %v746 = vunpack.c.l.b16 %v698
    %v747 = vunpack.c.l.b16 %v699
    %v748 = vunpack.c.l.b16 %v700
    %v749 = vunpack.c.l.b16 %v701
    %v750 = vunpack.c.l.b16 %v702
    %v751 = vunpack.c.l.b16 %v703
    %v752 = vunpack.c.l.b16 %v704
    %v753 = vunpack.c.l.b16 %v705
    %v754 = vpack.c.b16 %v739, %v738
    %v755 = vpack.c.b16 %v741, %v740
    %v756 = vpack.c.b16 %v743, %v742
    %v757 = vpack.c.b16 %v745, %v744
    %v758 = vpack.c.b16 %v747, %v746
    %v759 = vpack.c.b16 %v749, %v748
    %v760 = vpack.c.b16 %v751, %v750
    %v761 = vpack.c.b16 %v753, %v752
    %v786 = vunpack.c.l.b16 %v706
    %v787 = vunpack.c.l.b16 %v707
    %v788 = vunpack.c.l.b16 %v708
    %v789 = vunpack.c.l.b16 %v709
    %v790 = vunpack.c.l.b16 %v710
    %v791 = vunpack.c.l.b16 %v711
    %v792 = vunpack.c.l.b16 %v712
    %v793 = vunpack.c.l.b16 %v713
    %v794 = vunpack.c.l.b16 %v714
    %v795 = vunpack.c.l.b16 %v715
    %v796 = vunpack.c.l.b16 %v716
    %v797 = vunpack.c.l.b16 %v717
    %v798 = vunpack.c.l.b16 %v718
    %v799 = vunpack.c.l.b16 %v719
    %v800 = vunpack.c.l.b16 %v720
    %v801 = vunpack.c.l.b16 %v721
    %v802 = vpack.c.b16 %v787, %v786
    %v803 = vpack.c.b16 %v789, %v788
    %v804 = vpack.c.b16 %v791, %v790
    %v805 = vpack.c.b16 %v793, %v792
    %v806 = vpack.c.b16 %v795, %v794
    %v807 = vpack.c.b16 %v797, %v796
    %v808 = vpack.c.b16 %v799, %v798
    %v809 = vpack.c.b16 %v801, %v800
    %818 = vmatpush.bf16.msra.mxu0 %v809
    %819 = vmatpush.bf16.msra.mxu0 %v808
    %820 = vmatpush.bf16.msra.mxu0 %v807
    %821 = vmatpush.bf16.msra.mxu0 %v806
    %822 = vmatpush.bf16.msra.mxu0 %v805
    %823 = vmatpush.bf16.msra.mxu0 %v804
    %824 = vmatpush.bf16.msra.mxu0 %v803
    %825 = vmatpush.bf16.msra.mxu0 %v802
    %826 = vmatmul.bf16.gmra.mxu0 %v754
    %v827 = vpop.f32.mrf.mxu0
    %v828 = vadd.f32 0.0, %v827
    %v829 = vpop.f32.mrf.mxu0
    %v830 = vadd.f32 0.0, %v829
    %831 = vmatmul.bf16.gmra.mxu0 %v755
    %v832 = vpop.f32.mrf.mxu0
    %v833 = vadd.f32 0.0, %v832
    %v834 = vpop.f32.mrf.mxu0
    %v835 = vadd.f32 0.0, %v834
    %836 = vmatmul.bf16.gmra.mxu0 %v756
    %v837 = vpop.f32.mrf.mxu0
    %v838 = vadd.f32 0.0, %v837
    %v839 = vpop.f32.mrf.mxu0
    %v840 = vadd.f32 0.0, %v839
    %841 = vmatmul.bf16.gmra.mxu0 %v757
    %v842 = vpop.f32.mrf.mxu0
    %v843 = vadd.f32 0.0, %v842
    %v844 = vpop.f32.mrf.mxu0
    %v845 = vadd.f32 0.0, %v844
    %846 = vmatmul.bf16.gmra.mxu0 %v758
    %v847 = vpop.f32.mrf.mxu0
    %v848 = vadd.f32 0.0, %v847
    %v849 = vpop.f32.mrf.mxu0
    %v850 = vadd.f32 0.0, %v849
    %851 = vmatmul.bf16.gmra.mxu0 %v759
    %v852 = vpop.f32.mrf.mxu0
    %v853 = vadd.f32 0.0, %v852
    %v854 = vpop.f32.mrf.mxu0
    %v855 = vadd.f32 0.0, %v854
    %856 = vmatmul.bf16.gmra.mxu0 %v760
    %v857 = vpop.f32.mrf.mxu0
    %v858 = vadd.f32 0.0, %v857
    %v859 = vpop.f32.mrf.mxu0
    %v860 = vadd.f32 0.0, %v859
    %861 = vmatmul.bf16.gmra.mxu0 %v761
    %v862 = vpop.f32.mrf.mxu0
    %v863 = vadd.f32 0.0, %v862
    %v864 = vpop.f32.mrf.mxu0
    %v865 = vadd.f32 0.0, %v864
    %866 = vdwg.mxu0
    %v867 = vpack.c.bf16 %v830, %v828
    %v868 = vpack.c.bf16 %v835, %v833
    %v869 = vpack.c.bf16 %v840, %v838
    %v870 = vpack.c.bf16 %v845, %v843
    %v871 = vpack.c.bf16 %v850, %v848
    %v872 = vpack.c.bf16 %v855, %v853
    %v873 = vpack.c.bf16 %v860, %v858
    %v874 = vpack.c.bf16 %v865, %v863
    %v876 = vperm.slane %v689, 0
    %v894 = vunpack.c.l.b16 %v672
    %v895 = vunpack.c.l.b16 %v673
    %v896 = vunpack.c.l.b16 %v674
    %v897 = vunpack.c.l.b16 %v675
    %v898 = vunpack.c.l.b16 %v676
    %v899 = vunpack.c.l.b16 %v677
    %v900 = vunpack.c.l.b16 %v678
    %v901 = vunpack.c.l.b16 %v679
    %v902 = vunpack.c.l.b16 %v680
    %v903 = vunpack.c.l.b16 %v681
    %v904 = vunpack.c.l.b16 %v682
    %v905 = vunpack.c.l.b16 %v683
    %v906 = vunpack.c.l.b16 %v684
    %v907 = vunpack.c.l.b16 %v685
    %v908 = vunpack.c.l.b16 %v686
    %v909 = vunpack.c.l.b16 %v687
    %v910 = vpack.c.b16 %v895, %v894
    %v911 = vpack.c.b16 %v897, %v896
    %v912 = vpack.c.b16 %v899, %v898
    %v913 = vpack.c.b16 %v901, %v900
    %v914 = vpack.c.b16 %v903, %v902
    %v915 = vpack.c.b16 %v905, %v904
    %v916 = vpack.c.b16 %v907, %v906
    %v917 = vpack.c.b16 %v909, %v908
    %926 = vmatpush.bf16.msra.mxu0 %v917
    %927 = vmatpush.bf16.msra.mxu0 %v916
    %928 = vmatpush.bf16.msra.mxu0 %v915
    %929 = vmatpush.bf16.msra.mxu0 %v914
    %930 = vmatpush.bf16.msra.mxu0 %v913
    %931 = vmatpush.bf16.msra.mxu0 %v912
    %932 = vmatpush.bf16.msra.mxu0 %v911
    %933 = vmatpush.bf16.msra.mxu0 %v910
    %934 = vmatmul.bf16.gmra.mxu0 %v867
    %v935 = vpop.f32.mrf.mxu0
    %v936 = vadd.f32 %v876, %v935
    %v937 = vpop.f32.mrf.mxu0
    %v938 = vadd.f32 %v876, %v937
    %939 = vmatmul.bf16.gmra.mxu0 %v868
    %v940 = vpop.f32.mrf.mxu0
    %v941 = vadd.f32 %v876, %v940
    %v942 = vpop.f32.mrf.mxu0
    %v943 = vadd.f32 %v876, %v942
    %944 = vmatmul.bf16.gmra.mxu0 %v869
    %v945 = vpop.f32.mrf.mxu0
    %v946 = vadd.f32 %v876, %v945
    %v947 = vpop.f32.mrf.mxu0
    %v948 = vadd.f32 %v876, %v947
    %949 = vmatmul.bf16.gmra.mxu0 %v870
    %v950 = vpop.f32.mrf.mxu0
    %v951 = vadd.f32 %v876, %v950
    %v952 = vpop.f32.mrf.mxu0
    %v953 = vadd.f32 %v876, %v952
    %954 = vmatmul.bf16.gmra.mxu0 %v871
    %v955 = vpop.f32.mrf.mxu0
    %v956 = vadd.f32 %v876, %v955
    %v957 = vpop.f32.mrf.mxu0
    %v958 = vadd.f32 %v876, %v957
    %959 = vmatmul.bf16.gmra.mxu0 %v872
    %v960 = vpop.f32.mrf.mxu0
    %v961 = vadd.f32 %v876, %v960
    %v962 = vpop.f32.mrf.mxu0
    %v963 = vadd.f32 %v876, %v962
    %964 = vmatmul.bf16.gmra.mxu0 %v873
    %v965 = vpop.f32.mrf.mxu0
    %v966 = vadd.f32 %v876, %v965
    %v967 = vpop.f32.mrf.mxu0
    %v968 = vadd.f32 %v876, %v967
    %969 = vmatmul.bf16.gmra.mxu0 %v874
    %v970 = vpop.f32.mrf.mxu0
    %v971 = vadd.f32 %v876, %v970
    %v972 = vpop.f32.mrf.mxu0
    %v973 = vadd.f32 %v876, %v972
    %974 = vdwg.mxu0
    %v975 = vmax.f32 %v936, 0.0
    %v976 = vmax.f32 %v938, 0.0
    %v977 = vmax.f32 %v941, 0.0
    %v978 = vmax.f32 %v943, 0.0
    %v979 = vmax.f32 %v946, 0.0
    %v980 = vmax.f32 %v948, 0.0
    %v981 = vmax.f32 %v951, 0.0
    %v982 = vmax.f32 %v953, 0.0
    %v983 = vmax.f32 %v956, 0.0
    %v984 = vmax.f32 %v958, 0.0
    %v985 = vmax.f32 %v961, 0.0
    %v986 = vmax.f32 %v963, 0.0
    %v987 = vmax.f32 %v966, 0.0
    %v988 = vmax.f32 %v968, 0.0
    %v989 = vmax.f32 %v971, 0.0
    %v990 = vmax.f32 %v973, 0.0
    %v991 = vpack.c.bf16 %v975, %v975
    %v992 = vpack.c.bf16 %v976, %v976
    %v993 = vpack.c.bf16 %v977, %v977
    %v994 = vpack.c.bf16 %v978, %v978
    %v995 = vpack.c.bf16 %v979, %v979
    %v996 = vpack.c.bf16 %v980, %v980
    %v997 = vpack.c.bf16 %v981, %v981
    %v998 = vpack.c.bf16 %v982, %v982
    %v999 = vpack.c.bf16 %v983, %v983
    %v1000 = vpack.c.bf16 %v984, %v984
    %v1001 = vpack.c.bf16 %v985, %v985
    %v1002 = vpack.c.bf16 %v986, %v986
    %v1003 = vpack.c.bf16 %v987, %v987
    %v1004 = vpack.c.bf16 %v988, %v988
    %v1005 = vpack.c.bf16 %v989, %v989
    %v1006 = vpack.c.bf16 %v990, %v990
    %1007 = vst [vmem:[#allocation2] sm:$0xf] %v991
    %1008 = vst [vmem:[#allocation2 + $0x4] sm:$0xf] %v992
    %1009 = vst [vmem:[#allocation2 + $0x8] sm:$0xf] %v993
    %1010 = vst [vmem:[#allocation2 + $0xc] sm:$0xf] %v994
    %1011 = vst [vmem:[#allocation2 + $0x10] sm:$0xf] %v995
    %1012 = vst [vmem:[#allocation2 + $0x14] sm:$0xf] %v996
    %1013 = vst [vmem:[#allocation2 + $0x18] sm:$0xf] %v997
    %1014 = vst [vmem:[#allocation2 + $0x1c] sm:$0xf] %v998
    %1015 = vst [vmem:[#allocation2 + $0x20] sm:$0xf] %v999
    %1016 = vst [vmem:[#allocation2 + $0x24] sm:$0xf] %v1000
    %1017 = vst [vmem:[#allocation2 + $0x28] sm:$0xf] %v1001
    %1018 = vst [vmem:[#allocation2 + $0x2c] sm:$0xf] %v1002
    %1019 = vst [vmem:[#allocation2 + $0x30] sm:$0xf] %v1003
    %1020 = vst [vmem:[#allocation2 + $0x34] sm:$0xf] %v1004
    %1021 = vst [vmem:[#allocation2 + $0x38] sm:$0xf] %v1005
    %1022 = vst [vmem:[#allocation2 + $0x3c] sm:$0xf] %v1006
    %v1023 = vld [vmem:[#allocation2] sm:$0xf]
    %v1024 = vld [vmem:[#allocation2 + $0x4] sm:$0xf]
    %v1025 = vld [vmem:[#allocation2 + $0x8] sm:$0xf]
    %v1026 = vld [vmem:[#allocation2 + $0xc] sm:$0xf]
    %v1027 = vld [vmem:[#allocation2 + $0x10] sm:$0xf]
    %v1028 = vld [vmem:[#allocation2 + $0x14] sm:$0xf]
    %v1029 = vld [vmem:[#allocation2 + $0x18] sm:$0xf]
    %v1030 = vld [vmem:[#allocation2 + $0x1c] sm:$0xf]
    %v1031 = vld [vmem:[#allocation2 + $0x20] sm:$0xf]
    %v1032 = vld [vmem:[#allocation2 + $0x24] sm:$0xf]
    %v1033 = vld [vmem:[#allocation2 + $0x28] sm:$0xf]
    %v1034 = vld [vmem:[#allocation2 + $0x2c] sm:$0xf]
    %v1035 = vld [vmem:[#allocation2 + $0x30] sm:$0xf]
    %v1036 = vld [vmem:[#allocation2 + $0x34] sm:$0xf]
    %v1037 = vld [vmem:[#allocation2 + $0x38] sm:$0xf]
    %v1038 = vld [vmem:[#allocation2 + $0x3c] sm:$0xf]
    %v1039 = vld [vmem:[#allocation12] sm:$0xf]
    %v1040 = vld [vmem:[#allocation12 + $0x4] sm:$0xf]
    %v1041 = vld [vmem:[#allocation12 + $0x8] sm:$0xf]
    %v1042 = vld [vmem:[#allocation12 + $0xc] sm:$0xf]
    %v1043 = vld [vmem:[#allocation12 + $0x10] sm:$0xf]
    %v1044 = vld [vmem:[#allocation12 + $0x14] sm:$0xf]
    %v1045 = vld [vmem:[#allocation12 + $0x18] sm:$0xf]
    %v1046 = vld [vmem:[#allocation12 + $0x1c] sm:$0xf]
    %v1047 = vld [vmem:[#allocation12 + $0x20] sm:$0xf]
    %v1048 = vld [vmem:[#allocation12 + $0x24] sm:$0xf]
    %v1049 = vld [vmem:[#allocation12 + $0x28] sm:$0xf]
    %v1050 = vld [vmem:[#allocation12 + $0x2c] sm:$0xf]
    %v1051 = vld [vmem:[#allocation12 + $0x30] sm:$0xf]
    %v1052 = vld [vmem:[#allocation12 + $0x34] sm:$0xf]
    %v1053 = vld [vmem:[#allocation12 + $0x38] sm:$0xf]
    %v1054 = vld [vmem:[#allocation12 + $0x3c] sm:$0xf]
    %v1055 = vld [vmem:[%s7] sm:$0x1]
    %v1057 = vperm.slane %v1055, 0
    %v1075 = vunpack.c.l.b16 %v1023
    %v1076 = vunpack.c.l.b16 %v1024
    %v1077 = vunpack.c.l.b16 %v1025
    %v1078 = vunpack.c.l.b16 %v1026
    %v1079 = vunpack.c.l.b16 %v1027
    %v1080 = vunpack.c.l.b16 %v1028
    %v1081 = vunpack.c.l.b16 %v1029
    %v1082 = vunpack.c.l.b16 %v1030
    %v1083 = vunpack.c.l.b16 %v1031
    %v1084 = vunpack.c.l.b16 %v1032
    %v1085 = vunpack.c.l.b16 %v1033
    %v1086 = vunpack.c.l.b16 %v1034
    %v1087 = vunpack.c.l.b16 %v1035
    %v1088 = vunpack.c.l.b16 %v1036
    %v1089 = vunpack.c.l.b16 %v1037
    %v1090 = vunpack.c.l.b16 %v1038
    %v1091 = vpack.c.b16 %v1076, %v1075
    %v1092 = vpack.c.b16 %v1078, %v1077
    %v1093 = vpack.c.b16 %v1080, %v1079
    %v1094 = vpack.c.b16 %v1082, %v1081
    %v1095 = vpack.c.b16 %v1084, %v1083
    %v1096 = vpack.c.b16 %v1086, %v1085
    %v1097 = vpack.c.b16 %v1088, %v1087
    %v1098 = vpack.c.b16 %v1090, %v1089
    %v1123 = vunpack.c.l.b16 %v1039
    %v1124 = vunpack.c.l.b16 %v1040
    %v1125 = vunpack.c.l.b16 %v1041
    %v1126 = vunpack.c.l.b16 %v1042
    %v1127 = vunpack.c.l.b16 %v1043
    %v1128 = vunpack.c.l.b16 %v1044
    %v1129 = vunpack.c.l.b16 %v1045
    %v1130 = vunpack.c.l.b16 %v1046
    %v1131 = vunpack.c.l.b16 %v1047
    %v1132 = vunpack.c.l.b16 %v1048
    %v1133 = vunpack.c.l.b16 %v1049
    %v1134 = vunpack.c.l.b16 %v1050
    %v1135 = vunpack.c.l.b16 %v1051
    %v1136 = vunpack.c.l.b16 %v1052
    %v1137 = vunpack.c.l.b16 %v1053
    %v1138 = vunpack.c.l.b16 %v1054
    %v1139 = vpack.c.b16 %v1124, %v1123
    %v1140 = vpack.c.b16 %v1126, %v1125
    %v1141 = vpack.c.b16 %v1128, %v1127
    %v1142 = vpack.c.b16 %v1130, %v1129
    %v1143 = vpack.c.b16 %v1132, %v1131
    %v1144 = vpack.c.b16 %v1134, %v1133
    %v1145 = vpack.c.b16 %v1136, %v1135
    %v1146 = vpack.c.b16 %v1138, %v1137
    %1155 = vmatpush.bf16.msra.mxu0 %v1146
    %1156 = vmatpush.bf16.msra.mxu0 %v1145
    %1157 = vmatpush.bf16.msra.mxu0 %v1144
    %1158 = vmatpush.bf16.msra.mxu0 %v1143
    %1159 = vmatpush.bf16.msra.mxu0 %v1142
    %1160 = vmatpush.bf16.msra.mxu0 %v1141
    %1161 = vmatpush.bf16.msra.mxu0 %v1140
    %1162 = vmatpush.bf16.msra.mxu0 %v1139
    %1163 = vmatmul.bf16.gmra.mxu0 %v1091
    %v1164 = vpop.f32.mrf.mxu0
    %v1165 = vadd.f32 %v1057, %v1164
    %v1166 = vpop.f32.mrf.mxu0
    %v1167 = vadd.f32 %v1057, %v1166
    %1168 = vmatmul.bf16.gmra.mxu0 %v1092
    %v1169 = vpop.f32.mrf.mxu0
    %v1170 = vadd.f32 %v1057, %v1169
    %v1171 = vpop.f32.mrf.mxu0
    %v1172 = vadd.f32 %v1057, %v1171
    %1173 = vmatmul.bf16.gmra.mxu0 %v1093
    %v1174 = vpop.f32.mrf.mxu0
    %v1175 = vadd.f32 %v1057, %v1174
    %v1176 = vpop.f32.mrf.mxu0
    %v1177 = vadd.f32 %v1057, %v1176
    %1178 = vmatmul.bf16.gmra.mxu0 %v1094
    %v1179 = vpop.f32.mrf.mxu0
    %v1180 = vadd.f32 %v1057, %v1179
    %v1181 = vpop.f32.mrf.mxu0
    %v1182 = vadd.f32 %v1057, %v1181
    %1183 = vmatmul.bf16.gmra.mxu0 %v1095
    %v1184 = vpop.f32.mrf.mxu0
    %v1185 = vadd.f32 %v1057, %v1184
    %v1186 = vpop.f32.mrf.mxu0
    %v1187 = vadd.f32 %v1057, %v1186
    %1188 = vmatmul.bf16.gmra.mxu0 %v1096
    %v1189 = vpop.f32.mrf.mxu0
    %v1190 = vadd.f32 %v1057, %v1189
    %v1191 = vpop.f32.mrf.mxu0
    %v1192 = vadd.f32 %v1057, %v1191
    %1193 = vmatmul.bf16.gmra.mxu0 %v1097
    %v1194 = vpop.f32.mrf.mxu0
    %v1195 = vadd.f32 %v1057, %v1194
    %v1196 = vpop.f32.mrf.mxu0
    %v1197 = vadd.f32 %v1057, %v1196
    %1198 = vmatmul.bf16.gmra.mxu0 %v1098
    %v1199 = vpop.f32.mrf.mxu0
    %v1200 = vadd.f32 %v1057, %v1199
    %v1201 = vpop.f32.mrf.mxu0
    %v1202 = vadd.f32 %v1057, %v1201
    %1203 = vdwg.mxu0
    %1204 = vst [vmem:[#allocation13] sm:$0xff] %v1165
    %1205 = vst [vmem:[#allocation13 + $0x8] sm:$0xff] %v1167
    %1206 = vst [vmem:[#allocation13 + $0x10] sm:$0xff] %v1170
    %1207 = vst [vmem:[#allocation13 + $0x18] sm:$0xff] %v1172
    %1208 = vst [vmem:[#allocation13 + $0x20] sm:$0xff] %v1175
    %1209 = vst [vmem:[#allocation13 + $0x28] sm:$0xff] %v1177
    %1210 = vst [vmem:[#allocation13 + $0x30] sm:$0xff] %v1180
    %1211 = vst [vmem:[#allocation13 + $0x38] sm:$0xff] %v1182
    %1212 = vst [vmem:[#allocation13 + $0x40] sm:$0xff] %v1185
    %1213 = vst [vmem:[#allocation13 + $0x48] sm:$0xff] %v1187
    %1214 = vst [vmem:[#allocation13 + $0x50] sm:$0xff] %v1190
    %1215 = vst [vmem:[#allocation13 + $0x58] sm:$0xff] %v1192
    %1216 = vst [vmem:[#allocation13 + $0x60] sm:$0xff] %v1195
    %1217 = vst [vmem:[#allocation13 + $0x68] sm:$0xff] %v1197
    %1218 = vst [vmem:[#allocation13 + $0x70] sm:$0xff] %v1200
    %1219 = vst [vmem:[#allocation13 + $0x78] sm:$0xff] %v1202
    // Predicated region
    $region54: #{tpu_custom_call.1} parent=1 // pred_check
      _
    $region55: #{tpu_custom_call.1} parent=1 // pred_check_branch
      %1221 = sbr.rel (0) target = $region57
    $region56: #{tpu_custom_call.1} parent=1 // pred_region
      %1223 = vsyncadd [#allocation6], 0
      %s1224 = sshll.u32 [#allocation13], 4
      %s1225 = int_to_ptr.vmem [resolvable:$true] %s1224
      %s1226 = sshll.u32 %s8, 4
      %s1227 = int_to_ptr.hbm [resolvable:$true] %s1226
      %1232 = dma.vmem_to_hbm [thread:$0]  %s1225, 2048, %s1227, [#allocation6], 128, 128, 8
    $region57: #{tpu_custom_call.1} parent=1 // pred_fallthru
      _
    // Predicated region
    $region58: #{tpu_custom_call.1} parent=1 // pred_check
      _
    $region59: #{tpu_custom_call.1} parent=1 // pred_check_branch
      %1234 = sbr.rel (0) target = $region61
    $region60: #{tpu_custom_call.1} parent=1 // pred_region
      %1236 = dma.done [#allocation6], 2048
    $region61: #{tpu_custom_call.1} parent=1 // pred_fallthru
      _
    %1237 = vsyncpa [#allocation5], 1
    %1238 = vsyncpa [#allocation8], 1
    %1239 = vsyncpa [#allocation11], 1
    %1240 = vsyncpa [#allocation6], 1

</llo_original>
